<compile_context>
chip_gen: v5e
topology: v5e:2x2
jax: 0.10.0
libtpu: 0.0.40
codegen_flags: <defaults>
</compile_context>

<pallas_src>
import functools

import jax
import jax.numpy as jnp
from jax import lax
from jax.experimental import pallas as pl
from jax.experimental.pallas import tpu as pltpu

_LANE = 128


def _round_up(v, m):
    return ((v + m - 1) // m) * m


def qnetwork_kernel(x_ref, w1_ref, b1_ref, w2_ref, b2_ref, w3_ref, b3_ref, o_ref):
    """Fused 3-layer MLP; x arrives batch-major, compute runs feature-major.

    x_ref  : [TILE_B, in_size]   f32  (natural layout, cast/transpose in-kernel)
    wN_ref : [out_f, in_f]       bf16 (PyTorch nn.Linear layout, VMEM-resident)
    bN_ref : [out_f, 1]          f32  (lane-broadcast)
    o_ref  : [out_size, TILE_B]  f32  (batch on lanes -> lane-dense stores)
    """
    x = x_ref[...].astype(jnp.bfloat16)                       # [TILE_B, in]

    # Layer 1: h1[o, b] = sum_k w1[o, k] * x[b, k]   (A @ B.T on the MXU)
    h1 = lax.dot_general(
        w1_ref[...], x,
        dimension_numbers=(((1,), (1,)), ((), ())),
        preferred_element_type=jnp.float32)                   # [64, TILE_B]
    h1 = jnp.maximum(h1 + b1_ref[...], 0.0)

    # Layer 2: Linear(64 -> 64) + ReLU
    h2 = jnp.dot(w2_ref[...], h1.astype(jnp.bfloat16),
                 preferred_element_type=jnp.float32)          # [64, TILE_B]
    h2 = jnp.maximum(h2 + b2_ref[...], 0.0)

    # Layer 3: Linear(64 -> output_size), no activation
    out = jnp.dot(w3_ref[...], h2.astype(jnp.bfloat16),
                  preferred_element_type=jnp.float32)         # [out, TILE_B]
    o_ref[...] = (out + b3_ref[...]).astype(o_ref.dtype)


@functools.partial(jax.jit, static_argnames=("tile_b", "batch_major_out"))
def qnetwork_forward(x, params, *, tile_b=8192, batch_major_out=True):
    """x: [B, input_size] f32. params: w1,b1,w2,b2,w3,b3 (PyTorch [out,in] layout).

    Returns [B, output_size] f32 Q-values (or [output_size, B] if
    batch_major_out=False, which skips the final output transpose).
    """
    B, in_size = x.shape
    hidden = params["w1"].shape[0]
    out_size = params["w3"].shape[0]

    # Batch tiling: always pad to a multiple of 128 (lane-dense tiles).  For
    # larger batches, use >=2 grid steps (keeps both v7x TCs busy) and cap the
    # tile by tile_b (VMEM budget: ~2.5 KB/col incl. double buffers & temps).
    b128 = _round_up(B, _LANE)
    if b128 <= 2 * _LANE:
        tb = b128
        b_pad = b128
    else:
        tb = min(tile_b, _round_up(pl.cdiv(b128, 2), _LANE))
        b_pad = _round_up(b128, tb)

    xp = x if b_pad == B else jnp.pad(x, ((0, b_pad - B), (0, 0)))

    w1 = params["w1"].astype(jnp.bfloat16)
    w2 = params["w2"].astype(jnp.bfloat16)
    w3 = params["w3"].astype(jnp.bfloat16)
    b1, b2, b3 = params["b1"], params["b2"], params["b3"]

    # Constant block index => weights/biases DMA'd once, resident across steps.
    resident = lambda shape: pl.BlockSpec(shape, lambda i: (0, 0))

    cost = pl.CostEstimate(
        flops=2 * b_pad * (in_size * hidden + hidden * hidden + hidden * out_size),
        transcendentals=0,
        bytes_accessed=(4 * b_pad * in_size                      # x read (f32)
                        + 4 * out_size * b_pad                   # out write (f32)
                        + 2 * (hidden * in_size + hidden * hidden + out_size * hidden)
                        + 4 * (2 * hidden + out_size)))          # weights + biases

    out_t = pl.pallas_call(
        qnetwork_kernel,
        out_shape=jax.ShapeDtypeStruct((out_size, b_pad), jnp.float32),
        grid=(b_pad // tb,),
        in_specs=[
            pl.BlockSpec((tb, in_size), lambda i: (i, 0)),       # x: streamed batch
            resident(w1.shape), resident(b1.shape),
            resident(w2.shape), resident(b2.shape),
            resident(w3.shape), resident(b3.shape),
        ],
        out_specs=pl.BlockSpec((out_size, tb), lambda i: (0, i)),
        compiler_params=pltpu.CompilerParams(
            dimension_semantics=("parallel",),                   # v7x: 2 TCs
            vmem_limit_bytes=48 * 1024 * 1024,                   # > v5e 16MiB default, < v7x 64MiB physical
        ),
        cost_estimate=cost,
    )(xp, w1, b1, w2, b2, w3, b3)

    if batch_major_out:
        return out_t[:, :B].T                                    # [B, out_size]
    return out_t[:, :B]                                          # [out_size, B] (no transpose pass)


def init_params(key, input_size, output_size, hidden=64):
    """Deterministic init mimicking nn.Linear's U(-1/sqrt(fan_in), 1/sqrt(fan_in)).

    Weights stored in PyTorch layout [out_features, in_features]; biases as
    [out_features, 1] for lane-broadcast inside the kernel.
    """
    ks = jax.random.split(key, 6)

    def linear(kw, kb, fan_in, fan_out):
        bound = 1.0 / jnp.sqrt(jnp.float32(fan_in))
        w = jax.random.uniform(kw, (fan_out, fan_in), jnp.float32, -bound, bound)
        b = jax.random.uniform(kb, (fan_out, 1), jnp.float32, -bound, bound)
        return w, b

    w1, b1 = linear(ks[0], ks[1], input_size, hidden)
    w2, b2 = linear(ks[2], ks[3], hidden, hidden)
    w3, b3 = linear(ks[4], ks[5], hidden, output_size)
    return {"w1": w1, "b1": b1, "w2": w2, "b2": b2, "w3": w3, "b3": b3}


def ref_forward(x, params):
    """Plain-JAX reference with the same bf16-operand / f32-accumulate numerics."""
    bf16 = jnp.bfloat16

    def layer(h, w, b, relu):
        y = jnp.dot(h.astype(bf16), w.astype(bf16).T,
                    preferred_element_type=jnp.float32) + b.reshape(1, -1)
        return jnp.maximum(y, 0.0) if relu else y

    h = layer(x, params["w1"], params["b1"], True)
    h = layer(h, params["w2"], params["b2"], True)
    return layer(h, params["w3"], params["b3"], False)


if __name__ == "__main__":
    key = jax.random.PRNGKey(0)
    k_x, k_p, k_x2 = jax.random.split(key, 3)

    input_size, output_size = 32, 8
    params = init_params(k_p, input_size, output_size)

    # Small case: single 128-wide (lane-dense) block.
    x_small = jax.random.normal(k_x, (8, input_size), dtype=jnp.float32)
    out_small = jax.block_until_ready(qnetwork_forward(x_small, params))
    ref_small = ref_forward(x_small, params)
    assert out_small.shape == (8, output_size)
    assert jnp.allclose(out_small, ref_small, atol=1e-2, rtol=1e-2)

    # Ragged larger case: exercises the pipelined multi-step batch grid + padding.
    x_big = jax.random.normal(k_x2, (300, input_size), dtype=jnp.float32)
    out_big = jax.block_until_ready(qnetwork_forward(x_big, params, tile_b=128))
    ref_big = ref_forward(x_big, params)
    assert out_big.shape == (300, output_size)
    assert jnp.allclose(out_big, ref_big, atol=1e-2, rtol=1e-2)

    # Feature-major fast path (skips the output transpose).
    out_fm = jax.block_until_ready(
        qnetwork_forward(x_big, params, tile_b=128, batch_major_out=False))
    assert out_fm.shape == (output_size, 300)
    assert jnp.allclose(out_fm.T, ref_big, atol=1e-2, rtol=1e-2)

    print("KERNEL_OK")
</pallas_src>

<mosaic_0001>
module attributes {stable_mosaic.version = 11 : i64} {
  func.func @qnetwork_kernel(%arg0: i32, %arg1: memref<128x32xf32, #tpu.memory_space<vmem>>, %arg2: memref<64x32xbf16, #tpu.memory_space<vmem>>, %arg3: memref<64x1xf32, #tpu.memory_space<vmem>>, %arg4: memref<64x64xbf16, #tpu.memory_space<vmem>>, %arg5: memref<64x1xf32, #tpu.memory_space<vmem>>, %arg6: memref<8x64xbf16, #tpu.memory_space<vmem>>, %arg7: memref<8x1xf32, #tpu.memory_space<vmem>>, %arg8: memref<8x128xf32, #tpu.memory_space<vmem>>) attributes {dimension_semantics = [#tpu.dimension_semantics<parallel>], iteration_bounds = array<i64: 1>, scalar_prefetch = 0 : i64, scratch_operands = 0 : i64, tpu.core_type = #tpu.core_type<tc>, window_params = [{transform_indices = @transform_0, window_bounds = array<i64: 128, 32>}, {pipeline_mode = #tpu.pipeline_mode<synchronous>, transform_indices = @transform_1, window_bounds = array<i64: 64, 32>}, {pipeline_mode = #tpu.pipeline_mode<synchronous>, transform_indices = @transform_2, window_bounds = array<i64: 64, 1>}, {pipeline_mode = #tpu.pipeline_mode<synchronous>, transform_indices = @transform_3, window_bounds = array<i64: 64, 64>}, {pipeline_mode = #tpu.pipeline_mode<synchronous>, transform_indices = @transform_4, window_bounds = array<i64: 64, 1>}, {pipeline_mode = #tpu.pipeline_mode<synchronous>, transform_indices = @transform_5, window_bounds = array<i64: 8, 64>}, {pipeline_mode = #tpu.pipeline_mode<synchronous>, transform_indices = @transform_6, window_bounds = array<i64: 8, 1>}, {transform_indices = @transform_7, window_bounds = array<i64: 8, 128>}]} {
    %c0 = arith.constant 0 : index
    %c0_0 = arith.constant 0 : index
    %0 = vector.load %arg1[%c0, %c0_0] : memref<128x32xf32, #tpu.memory_space<vmem>>, vector<128x32xf32>
    %1 = arith.truncf %0 : vector<128x32xf32> to vector<128x32xbf16>
    %c0_1 = arith.constant 0 : index
    %c0_2 = arith.constant 0 : index
    %2 = vector.load %arg2[%c0_1, %c0_2] : memref<64x32xbf16, #tpu.memory_space<vmem>>, vector<64x32xbf16>
    %cst = arith.constant dense<0.000000e+00> : vector<64x128xf32>
    %3 = tpu.matmul %2, %1, %cst {dimension_numbers = #tpu.dot_dimension_numbers<[1], [1], [0], [0], [0, 0, 1, 0], [], []>} : vector<64x32xbf16>, vector<128x32xbf16>, vector<64x128xf32> -> vector<64x128xf32>
    %c0_3 = arith.constant 0 : index
    %c0_4 = arith.constant 0 : index
    %4 = vector.load %arg3[%c0_3, %c0_4] : memref<64x1xf32, #tpu.memory_space<vmem>>, vector<64x1xf32>
    %5 = vector.broadcast %4 : vector<64x1xf32> to vector<64x128xf32>
    %6 = arith.addf %3, %5 : vector<64x128xf32>
    %cst_5 = arith.constant 0.000000e+00 : f32
    %7 = vector.broadcast %cst_5 : f32 to vector<64x128xf32>
    %8 = arith.maximumf %6, %7 : vector<64x128xf32>
    %c0_6 = arith.constant 0 : index
    %c0_7 = arith.constant 0 : index
    %9 = vector.load %arg4[%c0_6, %c0_7] : memref<64x64xbf16, #tpu.memory_space<vmem>>, vector<64x64xbf16>
    %10 = arith.truncf %8 : vector<64x128xf32> to vector<64x128xbf16>
    %cst_8 = arith.constant dense<0.000000e+00> : vector<64x128xf32>
    %11 = tpu.matmul %9, %10, %cst_8 {dimension_numbers = #tpu.dot_dimension_numbers<[1], [0], [0], [1], [0, 0, 1, 1], [], []>} : vector<64x64xbf16>, vector<64x128xbf16>, vector<64x128xf32> -> vector<64x128xf32>
    %c0_9 = arith.constant 0 : index
    %c0_10 = arith.constant 0 : index
    %12 = vector.load %arg5[%c0_9, %c0_10] : memref<64x1xf32, #tpu.memory_space<vmem>>, vector<64x1xf32>
    %13 = vector.broadcast %12 : vector<64x1xf32> to vector<64x128xf32>
    %14 = arith.addf %11, %13 : vector<64x128xf32>
    %cst_11 = arith.constant 0.000000e+00 : f32
    %15 = vector.broadcast %cst_11 : f32 to vector<64x128xf32>
    %16 = arith.maximumf %14, %15 : vector<64x128xf32>
    %c0_12 = arith.constant 0 : index
    %c0_13 = arith.constant 0 : index
    %17 = vector.load %arg6[%c0_12, %c0_13] : memref<8x64xbf16, #tpu.memory_space<vmem>>, vector<8x64xbf16>
    %18 = arith.truncf %16 : vector<64x128xf32> to vector<64x128xbf16>
    %cst_14 = arith.constant dense<0.000000e+00> : vector<8x128xf32>
    %19 = tpu.matmul %17, %18, %cst_14 {dimension_numbers = #tpu.dot_dimension_numbers<[1], [0], [0], [1], [0, 0, 1, 1], [], []>} : vector<8x64xbf16>, vector<64x128xbf16>, vector<8x128xf32> -> vector<8x128xf32>
    %c0_15 = arith.constant 0 : index
    %c0_16 = arith.constant 0 : index
    %20 = vector.load %arg7[%c0_15, %c0_16] : memref<8x1xf32, #tpu.memory_space<vmem>>, vector<8x1xf32>
    %21 = vector.broadcast %20 : vector<8x1xf32> to vector<8x128xf32>
    %22 = arith.addf %19, %21 : vector<8x128xf32>
    %c0_17 = arith.constant 0 : index
    %c0_18 = arith.constant 0 : index
    %23 = vector.load %arg8[%c0_17, %c0_18] : memref<8x128xf32, #tpu.memory_space<vmem>>, vector<8x128xf32>
    tpu.vector_store %arg8[%c0_17, %c0_18], %22 {strides = array<i32>} : memref<8x128xf32, #tpu.memory_space<vmem>>, vector<8x128xf32>,
    return
  }
  func.func @transform_0(%arg0: i32) -> (i32, i32) {
    %c0_i32 = arith.constant 0 : i32
    %c0_i32_0 = arith.constant 0 : i32
    return %arg0, %c0_i32 : i32, i32
  }
  func.func @transform_1(%arg0: i32) -> (i32, i32) {
    %c0_i32 = arith.constant 0 : i32
    %c0_i32_0 = arith.constant 0 : i32
    %c0_i32_1 = arith.constant 0 : i32
    return %c0_i32, %c0_i32_0 : i32, i32
  }
  func.func @transform_2(%arg0: i32) -> (i32, i32) {
    %c0_i32 = arith.constant 0 : i32
    %c0_i32_0 = arith.constant 0 : i32
    %c0_i32_1 = arith.constant 0 : i32
    return %c0_i32, %c0_i32_0 : i32, i32
  }
  func.func @transform_3(%arg0: i32) -> (i32, i32) {
    %c0_i32 = arith.constant 0 : i32
    %c0_i32_0 = arith.constant 0 : i32
    %c0_i32_1 = arith.constant 0 : i32
    return %c0_i32, %c0_i32_0 : i32, i32
  }
  func.func @transform_4(%arg0: i32) -> (i32, i32) {
    %c0_i32 = arith.constant 0 : i32
    %c0_i32_0 = arith.constant 0 : i32
    %c0_i32_1 = arith.constant 0 : i32
    return %c0_i32, %c0_i32_0 : i32, i32
  }
  func.func @transform_5(%arg0: i32) -> (i32, i32) {
    %c0_i32 = arith.constant 0 : i32
    %c0_i32_0 = arith.constant 0 : i32
    %c0_i32_1 = arith.constant 0 : i32
    return %c0_i32, %c0_i32_0 : i32, i32
  }
  func.func @transform_6(%arg0: i32) -> (i32, i32) {
    %c0_i32 = arith.constant 0 : i32
    %c0_i32_0 = arith.constant 0 : i32
    %c0_i32_1 = arith.constant 0 : i32
    return %c0_i32, %c0_i32_0 : i32, i32
  }
  func.func @transform_7(%arg0: i32) -> (i32, i32) {
    %c0_i32 = arith.constant 0 : i32
    %c0_i32_0 = arith.constant 0 : i32
    return %c0_i32, %arg0 : i32, i32
  }
}

</mosaic_0001>

<llo_original>
// kernel: qnetwork_forward.1
$region0: #{qnetwork_forward.1}
  #allocation0 [shape = 'u32[]', space=smem, size = 0x4, offset = 0x4, fixed_abs, tag = 'smem constant byte address 0x4 - core index']
  #allocation1 [shape = 'u32[72,128]{1,0:T(1,128)}', space=vmem, size = 0x9000, scoped, tag = 'internal scratch']
  %s0 = inlined_call_operand.vmem [shape: f32[128,32], index: 0, kind: input, shape index: {}]
  %s1 = inlined_call_operand.vmem [shape: bf16[64,32], index: 1, kind: input, shape index: {}]
  %s2 = inlined_call_operand.vmem [shape: f32[64,1], index: 2, kind: input, shape index: {}]
  %s3 = inlined_call_operand.vmem [shape: bf16[64,64], index: 3, kind: input, shape index: {}]
  %s4 = inlined_call_operand.vmem [shape: f32[64,1], index: 4, kind: input, shape index: {}]
  %s5 = inlined_call_operand.vmem [shape: bf16[8,64], index: 5, kind: input, shape index: {}]
  %s6 = inlined_call_operand.vmem [shape: f32[8,1], index: 6, kind: input, shape index: {}]
  %s7 = inlined_call_operand.vmem [shape: f32[8,128], index: 7, kind: output, shape index: {}]
  %s8 = sld [smem:[#allocation0]]
  $region38: #{qnetwork_forward.1} parent=0
    _
  %s10 = ssub.s32 1, %s8
  %s11 = scalar_select 0, %s10, %s8
  // Predicated region
  $region2: #{qnetwork_forward.1} parent=0 // pred_check
    _
  $region3: #{qnetwork_forward.1} parent=0 // pred_check_branch
    %13 = sbr.rel (0) target = $region5
  $region4: #{qnetwork_forward.1} parent=0 // pred_region
    _
  $region5: #{qnetwork_forward.1} parent=0 // pred_fallthru
    _
  // Predicated region
  $region6: #{qnetwork_forward.1} parent=0 // pred_check
    _
  $region7: #{qnetwork_forward.1} parent=0 // pred_check_branch
    %15 = sbr.rel (0) target = $region9
  $region8: #{qnetwork_forward.1} parent=0 // pred_region
    _
  $region9: #{qnetwork_forward.1} parent=0 // pred_fallthru
    _
  // Predicated region
  $region10: #{qnetwork_forward.1} parent=0 // pred_check
    _
  $region11: #{qnetwork_forward.1} parent=0 // pred_check_branch
    %17 = sbr.rel (0) target = $region13
  $region12: #{qnetwork_forward.1} parent=0 // pred_region
    _
  $region13: #{qnetwork_forward.1} parent=0 // pred_fallthru
    _
  // Predicated region
  $region14: #{qnetwork_forward.1} parent=0 // pred_check
    _
  $region15: #{qnetwork_forward.1} parent=0 // pred_check_branch
    %19 = sbr.rel (0) target = $region17
  $region16: #{qnetwork_forward.1} parent=0 // pred_region
    _
  $region17: #{qnetwork_forward.1} parent=0 // pred_fallthru
    _
  // Predicated region
  $region18: #{qnetwork_forward.1} parent=0 // pred_check
    _
  $region19: #{qnetwork_forward.1} parent=0 // pred_check_branch
    %21 = sbr.rel (0) target = $region21
  $region20: #{qnetwork_forward.1} parent=0 // pred_region
    _
  $region21: #{qnetwork_forward.1} parent=0 // pred_fallthru
    _
  // Predicated region
  $region22: #{qnetwork_forward.1} parent=0 // pred_check
    _
  $region23: #{qnetwork_forward.1} parent=0 // pred_check_branch
    %23 = sbr.rel (0) target = $region25
  $region24: #{qnetwork_forward.1} parent=0 // pred_region
    _
  $region25: #{qnetwork_forward.1} parent=0 // pred_fallthru
    _
  // Predicated region
  $region26: #{qnetwork_forward.1} parent=0 // pred_check
    _
  $region27: #{qnetwork_forward.1} parent=0 // pred_check_branch
    %25 = sbr.rel (0) target = $region29
  $region28: #{qnetwork_forward.1} parent=0 // pred_region
    _
  $region29: #{qnetwork_forward.1} parent=0 // pred_fallthru
    _
  %v27 = vld [vmem:[%s0] sm:$0xff]
  %v28 = vld [vmem:[%s0 + $0x8] sm:$0xff]
  %v29 = vld [vmem:[%s0 + $0x10] sm:$0xff]
  %v30 = vld [vmem:[%s0 + $0x18] sm:$0xff]
  %v31 = vld [vmem:[%s0 + $0x20] sm:$0xff]
  %v32 = vld [vmem:[%s0 + $0x28] sm:$0xff]
  %v33 = vld [vmem:[%s0 + $0x30] sm:$0xff]
  %v34 = vld [vmem:[%s0 + $0x38] sm:$0xff]
  %v35 = vld [vmem:[%s0 + $0x40] sm:$0xff]
  %v36 = vld [vmem:[%s0 + $0x48] sm:$0xff]
  %v37 = vld [vmem:[%s0 + $0x50] sm:$0xff]
  %v38 = vld [vmem:[%s0 + $0x58] sm:$0xff]
  %v39 = vld [vmem:[%s0 + $0x60] sm:$0xff]
  %v40 = vld [vmem:[%s0 + $0x68] sm:$0xff]
  %v41 = vld [vmem:[%s0 + $0x70] sm:$0xff]
  %v42 = vld [vmem:[%s0 + $0x78] sm:$0xff]
  %v43 = vpack.c.bf16 %v28, %v27
  %v44 = vpack.c.bf16 %v30, %v29
  %v45 = vpack.c.bf16 %v32, %v31
  %v46 = vpack.c.bf16 %v34, %v33
  %v47 = vpack.c.bf16 %v36, %v35
  %v48 = vpack.c.bf16 %v38, %v37
  %v49 = vpack.c.bf16 %v40, %v39
  %v50 = vpack.c.bf16 %v42, %v41
  %v51 = vld [vmem:[%s1] sm:$0xf]
  %v52 = vld [vmem:[%s1 + $0x4] sm:$0xf]
  %v53 = vld [vmem:[%s1 + $0x8] sm:$0xf]
  %v54 = vld [vmem:[%s1 + $0xc] sm:$0xf]
  %v55 = vld [vmem:[%s1 + $0x10] sm:$0xf]
  %v56 = vld [vmem:[%s1 + $0x14] sm:$0xf]
  %v57 = vld [vmem:[%s1 + $0x18] sm:$0xf]
  %v58 = vld [vmem:[%s1 + $0x1c] sm:$0xf]
  %v59 = vld [vmem:[%s2] sm:$0xff]
  %v60 = vld [vmem:[%s2 + $0x8] sm:$0xff]
  %v61 = vld [vmem:[%s2 + $0x10] sm:$0xff]
  %v62 = vld [vmem:[%s2 + $0x18] sm:$0xff]
  %v63 = vld [vmem:[%s2 + $0x20] sm:$0xff]
  %v64 = vld [vmem:[%s2 + $0x28] sm:$0xff]
  %v65 = vld [vmem:[%s2 + $0x30] sm:$0xff]
  %v66 = vld [vmem:[%s2 + $0x38] sm:$0xff]
  %68 = vset.pattern.permute.xlu0 0
  %69 = vperm.xlu0 %68, %v59
  %v70 = vpop.permute.xlu0 %69
  %73 = vset.pattern.permute.xlu0 0
  %74 = vperm.xlu0 %73, %v60
  %v75 = vpop.permute.xlu0 %74
  %78 = vset.pattern.permute.xlu0 0
  %79 = vperm.xlu0 %78, %v61
  %v80 = vpop.permute.xlu0 %79
  %83 = vset.pattern.permute.xlu0 0
  %84 = vperm.xlu0 %83, %v62
  %v85 = vpop.permute.xlu0 %84
  %88 = vset.pattern.permute.xlu0 0
  %89 = vperm.xlu0 %88, %v63
  %v90 = vpop.permute.xlu0 %89
  %93 = vset.pattern.permute.xlu0 0
  %94 = vperm.xlu0 %93, %v64
  %v95 = vpop.permute.xlu0 %94
  %98 = vset.pattern.permute.xlu0 0
  %99 = vperm.xlu0 %98, %v65
  %v100 = vpop.permute.xlu0 %99
  %103 = vset.pattern.permute.xlu0 0
  %104 = vperm.xlu0 %103, %v66
  %v105 = vpop.permute.xlu0 %104
  %v115 = vunpack.c.l.b16 %v51
  %v116 = vunpack.c.l.b16 %v52
  %v117 = vunpack.c.l.b16 %v53
  %v118 = vunpack.c.l.b16 %v54
  %v119 = vunpack.c.l.b16 %v55
  %v120 = vunpack.c.l.b16 %v56
  %v121 = vunpack.c.l.b16 %v57
  %v122 = vunpack.c.l.b16 %v58
  %v123 = vpack.c.b16 %v116, %v115
  %v124 = vpack.c.b16 %v118, %v117
  %v125 = vpack.c.b16 %v120, %v119
  %v126 = vpack.c.b16 %v122, %v121
  %vm127 = vcmask 261120
  %v129 = vsel %vm127, %v123, 0
  %v132 = vsel %vm127, %v124, 0
  %v135 = vsel %vm127, %v125, 0
  %v138 = vsel %vm127, %v126, 0
  %v141 = vsel %vm127, %v43, 0
  %v144 = vsel %vm127, %v44, 0
  %v147 = vsel %vm127, %v45, 0
  %v150 = vsel %vm127, %v46, 0
  %v153 = vsel %vm127, %v47, 0
  %v156 = vsel %vm127, %v48, 0
  %v159 = vsel %vm127, %v49, 0
  %v162 = vsel %vm127, %v50, 0
  %164 = vmatpush.bf16.xpose.msra.mxu0 %v162
  %165 = vmatpush.bf16.xpose.msra.mxu0 %v159
  %166 = vmatpush.bf16.xpose.msra.mxu0 %v156
  %167 = vmatpush.bf16.xpose.msra.mxu0 %v153
  %168 = vmatpush.bf16.xpose.msra.mxu0 %v150
  %169 = vmatpush.bf16.xpose.msra.mxu0 %v147
  %170 = vmatpush.bf16.xpose.msra.mxu0 %v144
  %171 = vmatpush.bf16.xpose.msra.mxu0 %v141
  %172 = vmatmul.bf16.gmra.mxu0 %v129
  %v173 = vpop.f32.mrf.mxu0
  %v174 = vadd.f32 %v70, %v173
  %v175 = vpop.f32.mrf.mxu0
  %v176 = vadd.f32 %v75, %v175
  %177 = vmatmul.bf16.gmra.mxu0 %v132
  %v178 = vpop.f32.mrf.mxu0
  %v179 = vadd.f32 %v80, %v178
  %v180 = vpop.f32.mrf.mxu0
  %v181 = vadd.f32 %v85, %v180
  %182 = vmatmul.bf16.gmra.mxu0 %v135
  %v183 = vpop.f32.mrf.mxu0
  %v184 = vadd.f32 %v90, %v183
  %v185 = vpop.f32.mrf.mxu0
  %v186 = vadd.f32 %v95, %v185
  %187 = vmatmul.bf16.gmra.mxu0 %v138
  %v188 = vpop.f32.mrf.mxu0
  %v189 = vadd.f32 %v100, %v188
  %v190 = vpop.f32.mrf.mxu0
  %v191 = vadd.f32 %v105, %v190
  %192 = vdwg.mxu0
  %v193 = vmax.f32 %v174, 0.0
  %v194 = vmax.f32 %v176, 0.0
  %v195 = vmax.f32 %v179, 0.0
  %v196 = vmax.f32 %v181, 0.0
  %v197 = vmax.f32 %v184, 0.0
  %v198 = vmax.f32 %v186, 0.0
  %v199 = vmax.f32 %v189, 0.0
  %v200 = vmax.f32 %v191, 0.0
  %v201 = vld [vmem:[%s3] sm:$0xf]
  %v202 = vld [vmem:[%s3 + $0x4] sm:$0xf]
  %v203 = vld [vmem:[%s3 + $0x8] sm:$0xf]
  %v204 = vld [vmem:[%s3 + $0xc] sm:$0xf]
  %v205 = vld [vmem:[%s3 + $0x10] sm:$0xf]
  %v206 = vld [vmem:[%s3 + $0x14] sm:$0xf]
  %v207 = vld [vmem:[%s3 + $0x18] sm:$0xf]
  %v208 = vld [vmem:[%s3 + $0x1c] sm:$0xf]
  %v209 = vpack.c.bf16 %v194, %v193
  %v210 = vpack.c.bf16 %v196, %v195
  %v211 = vpack.c.bf16 %v198, %v197
  %v212 = vpack.c.bf16 %v200, %v199
  %v213 = vld [vmem:[%s4] sm:$0xff]
  %v214 = vld [vmem:[%s4 + $0x8] sm:$0xff]
  %v215 = vld [vmem:[%s4 + $0x10] sm:$0xff]
  %v216 = vld [vmem:[%s4 + $0x18] sm:$0xff]
  %v217 = vld [vmem:[%s4 + $0x20] sm:$0xff]
  %v218 = vld [vmem:[%s4 + $0x28] sm:$0xff]
  %v219 = vld [vmem:[%s4 + $0x30] sm:$0xff]
  %v220 = vld [vmem:[%s4 + $0x38] sm:$0xff]
  %222 = vset.pattern.permute.xlu0 0
  %223 = vperm.xlu0 %222, %v213
  %v224 = vpop.permute.xlu0 %223
  %227 = vset.pattern.permute.xlu0 0
  %228 = vperm.xlu0 %227, %v214
  %v229 = vpop.permute.xlu0 %228
  %232 = vset.pattern.permute.xlu0 0
  %233 = vperm.xlu0 %232, %v215
  %v234 = vpop.permute.xlu0 %233
  %237 = vset.pattern.permute.xlu0 0
  %238 = vperm.xlu0 %237, %v216
  %v239 = vpop.permute.xlu0 %238
  %242 = vset.pattern.permute.xlu0 0
  %243 = vperm.xlu0 %242, %v217
  %v244 = vpop.permute.xlu0 %243
  %247 = vset.pattern.permute.xlu0 0
  %248 = vperm.xlu0 %247, %v218
  %v249 = vpop.permute.xlu0 %248
  %252 = vset.pattern.permute.xlu0 0
  %253 = vperm.xlu0 %252, %v219
  %v254 = vpop.permute.xlu0 %253
  %257 = vset.pattern.permute.xlu0 0
  %258 = vperm.xlu0 %257, %v220
  %v259 = vpop.permute.xlu0 %258
  %v269 = vunpack.c.l.b16 %v201
  %v270 = vunpack.c.l.b16 %v202
  %v271 = vunpack.c.l.b16 %v203
  %v272 = vunpack.c.l.b16 %v204
  %v273 = vunpack.c.l.b16 %v205
  %v274 = vunpack.c.l.b16 %v206
  %v275 = vunpack.c.l.b16 %v207
  %v276 = vunpack.c.l.b16 %v208
  %v277 = vpack.c.b16 %v270, %v269
  %v278 = vpack.c.b16 %v272, %v271
  %v279 = vpack.c.b16 %v274, %v273
  %v280 = vpack.c.b16 %v276, %v275
  %vm281 = vcmask 523264
  %v283 = vsel %vm281, %v277, 0
  %v286 = vsel %vm281, %v278, 0
  %v289 = vsel %vm281, %v279, 0
  %v292 = vsel %vm281, %v280, 0
  %294 = vmatpush.bf16.msra.mxu0 0
  %295 = vmatpush.bf16.msra.mxu0 0
  %296 = vmatpush.bf16.msra.mxu0 0
  %297 = vmatpush.bf16.msra.mxu0 0
  %298 = vmatpush.bf16.msra.mxu0 %v212
  %299 = vmatpush.bf16.msra.mxu0 %v211
  %300 = vmatpush.bf16.msra.mxu0 %v210
  %301 = vmatpush.bf16.msra.mxu0 %v209
  %302 = vmatmul.bf16.gmra.mxu0 %v283
  %v303 = vpop.f32.mrf.mxu0
  %v304 = vadd.f32 %v224, %v303
  %v305 = vpop.f32.mrf.mxu0
  %v306 = vadd.f32 %v229, %v305
  %307 = vmatmul.bf16.gmra.mxu0 %v286
  %v308 = vpop.f32.mrf.mxu0
  %v309 = vadd.f32 %v234, %v308
  %v310 = vpop.f32.mrf.mxu0
  %v311 = vadd.f32 %v239, %v310
  %312 = vmatmul.bf16.gmra.mxu0 %v289
  %v313 = vpop.f32.mrf.mxu0
  %v314 = vadd.f32 %v244, %v313
  %v315 = vpop.f32.mrf.mxu0
  %v316 = vadd.f32 %v249, %v315
  %317 = vmatmul.bf16.gmra.mxu0 %v292
  %v318 = vpop.f32.mrf.mxu0
  %v319 = vadd.f32 %v254, %v318
  %v320 = vpop.f32.mrf.mxu0
  %v321 = vadd.f32 %v259, %v320
  %322 = vdwg.mxu0
  %v323 = vmax.f32 %v304, 0.0
  %v324 = vmax.f32 %v306, 0.0
  %v325 = vmax.f32 %v309, 0.0
  %v326 = vmax.f32 %v311, 0.0
  %v327 = vmax.f32 %v314, 0.0
  %v328 = vmax.f32 %v316, 0.0
  %v329 = vmax.f32 %v319, 0.0
  %v330 = vmax.f32 %v321, 0.0
  %v331 = vld [vmem:[%s5] sm:$0xf]
  %v332 = vpack.c.bf16 %v324, %v323
  %v333 = vpack.c.bf16 %v326, %v325
  %v334 = vpack.c.bf16 %v328, %v327
  %v335 = vpack.c.bf16 %v330, %v329
  %v336 = vld [vmem:[%s6] sm:$0xff]
  %338 = vset.pattern.permute.xlu0 0
  %339 = vperm.xlu0 %338, %v336
  %v340 = vpop.permute.xlu0 %339
  %v343 = vsel %vm281, %v331, 0
  %345 = vmatpush.bf16.msra.mxu0 0
  %346 = vmatpush.bf16.msra.mxu0 0
  %347 = vmatpush.bf16.msra.mxu0 0
  %348 = vmatpush.bf16.msra.mxu0 0
  %349 = vmatpush.bf16.msra.mxu0 %v335
  %350 = vmatpush.bf16.msra.mxu0 %v334
  %351 = vmatpush.bf16.msra.mxu0 %v333
  %352 = vmatpush.bf16.msra.mxu0 %v332
  %353 = vmatmul.bf16.gmra.mxu0 %v343
  %v354 = vpop.f32.mrf.mxu0
  %v355 = vadd.f32 %v340, %v354
  %v356 = vpop.f32.mrf.mxu0
  %357 = vdwg.mxu0
  %358 = vst [vmem:[%s7] sm:$0xff] %v355
  // Predicated region
  $region30: #{qnetwork_forward.1} parent=0 // pred_check
    _
  $region31: #{qnetwork_forward.1} parent=0 // pred_check_branch
    %360 = sbr.rel (0) target = $region33
  $region32: #{qnetwork_forward.1} parent=0 // pred_region
    _
  $region33: #{qnetwork_forward.1} parent=0 // pred_fallthru
    _
  // Predicated region
  $region34: #{qnetwork_forward.1} parent=0 // pred_check
    _
  $region35: #{qnetwork_forward.1} parent=0 // pred_check_branch
    %362 = sbr.rel (0) target = $region37
  $region36: #{qnetwork_forward.1} parent=0 // pred_region
    _
  $region37: #{qnetwork_forward.1} parent=0 // pred_fallthru
    _

</llo_original>
